<compile_context>
chip_gen: v5e
topology: v5e:2x2
jax: 0.10.0
libtpu: 0.0.40
codegen_flags: <defaults>
</compile_context>

<pallas_src>
import functools

import jax
import jax.numpy as jnp
from jax.experimental import pallas as pl
from jax.experimental.pallas import tpu as pltpu

GELU_GAMMA = 1.7015043497085571  # NFNet scaled-GELU gamma
LANE = 128


def _scaled_gelu(x):
    # TODO(synk): timm uses exact (erf) GELU; tanh approximation keeps the
    # lowering on the EUP tanh path.
    return GELU_GAMMA * jax.nn.gelu(x, approximate=True)


def _round_up(x, m):
    return (x + m - 1) // m * m


def _pick_spatial_tile(hw, cap=512):
    """Largest multiple-of-8 divisor of hw that is <= cap (falls back to hw)."""
    t = min((hw // 8) * 8, cap)
    while t >= 8:
        if hw % t == 0:
            return t
        t -= 8
    return hw


# ----------------------------------------------------------------------------
# Pallas kernel: the entire reduced NFNet forward, fused.
#   stem matmul+GELU -> 1x1 conv+GELU -> 1x1 conv -> NF residual
#   -> 1x1 expansion+GELU -> partial global-avg-pool -> (last tile) Linear head
# ----------------------------------------------------------------------------
def _nfnet_fused_kernel(cols_ref, ws_ref, bs_ref, w1_ref, b1_ref, w2_ref,
                        b2_ref, wf_ref, bfin_ref, fcw_ref, fcb_ref,
                        o_ref, pool_acc, *, alpha, inv_hw):
    s = pl.program_id(1)

    @pl.when(s == 0)
    def _init():
        pool_acc[...] = jnp.zeros_like(pool_acc)

    cols = cols_ref[0]                                        # (ts, Kp) bf16

    # --- stem ScaledStdConv2d (as matmul) + scaled GELU ----------------------
    h = jnp.dot(cols, ws_ref[...], preferred_element_type=jnp.float32)
    h = _scaled_gelu(h + bs_ref[...])                         # (ts, Cp) f32

    # --- NF residual block: two 1x1 WS convs, residual add fused in ----------
    t = jnp.dot(h.astype(jnp.bfloat16), w1_ref[...],
                preferred_element_type=jnp.float32)
    t = _scaled_gelu(t + b1_ref[...])
    t = jnp.dot(t.astype(jnp.bfloat16), w2_ref[...],
                preferred_element_type=jnp.float32) + b2_ref[...]
    res = h + alpha * t                                       # (ts, Cp) f32

    # --- final 1x1 expansion conv + scaled GELU -------------------------------
    feat = jnp.dot(res.astype(jnp.bfloat16), wf_ref[...],
                   preferred_element_type=jnp.float32)
    feat = _scaled_gelu(feat + bfin_ref[...])                 # (ts, Fp) f32

    # --- global-average-pool partial sum as a ones-row matmul (rides the MXU)
    ones = jnp.ones((1, feat.shape[0]), jnp.float32)
    pool_acc[...] += jnp.dot(ones, feat, preferred_element_type=jnp.float32)

    # --- last spatial tile of this batch: finish pool + Linear head ----------
    @pl.when(s == pl.num_programs(1) - 1)
    def _head():
        pooled = pool_acc[...] * inv_hw                       # (1, Fp) f32
        o_ref[0] = (jnp.dot(pooled, fcw_ref[...],
                            preferred_element_type=jnp.float32)
                    + fcb_ref[...])


def nfnet_fused(cols, ws, bs, w1, b1, w2, b2, wf, bfin, fcw, fcb,
                *, alpha, hw):
    """cols: (B, HW, Kp) bf16; weights pre-standardized, zero-padded, bf16."""
    B, HW, Kp = cols.shape
    Cp = ws.shape[1]
    Fp = wf.shape[1]
    Np = fcw.shape[1]
    ts = _pick_spatial_tile(HW)

    kern = functools.partial(_nfnet_fused_kernel, alpha=alpha,
                             inv_hw=1.0 / hw)
    wcst = lambda shape: pl.BlockSpec(shape, lambda b, s: (0, 0))

    out = pl.pallas_call(
        kern,
        out_shape=jax.ShapeDtypeStruct((B, 1, Np), jnp.float32),
        grid=(B, HW // ts),
        in_specs=[
            pl.BlockSpec((1, ts, Kp), lambda b, s: (b, s, 0)),  # patches
            wcst((Kp, Cp)), wcst((1, Cp)),                      # stem
            wcst((Cp, Cp)), wcst((1, Cp)),                      # block conv1
            wcst((Cp, Cp)), wcst((1, Cp)),                      # block conv2
            wcst((Cp, Fp)), wcst((1, Fp)),                      # final expand
            wcst((Fp, Np)), wcst((1, Np)),                      # fc head
        ],
        out_specs=pl.BlockSpec((1, 1, Np), lambda b, s: (b, 0, 0)),
        scratch_shapes=[pltpu.VMEM((1, Fp), jnp.float32)],
        compiler_params=pltpu.CompilerParams(
            dimension_semantics=("parallel", "arbitrary")),
    )(cols, ws, bs, w1, b1, w2, b2, wf, bfin, fcw, fcb)
    return out.reshape(B, Np)


# ----------------------------------------------------------------------------
# Plain-JAX glue: weight standardization, im2col, zero-padding to lane widths
# ----------------------------------------------------------------------------
def standardize_weight(w, gain, eps=1e-5):
    """timm ScaledStdConv2d-style weight standardization. w: (Cout,Cin,kh,kw)."""
    fan_in = w.shape[1] * w.shape[2] * w.shape[3]
    mean = jnp.mean(w, axis=(1, 2, 3), keepdims=True)
    var = jnp.var(w, axis=(1, 2, 3), keepdims=True)
    scale = gain.reshape(-1, 1, 1, 1) * jax.lax.rsqrt(var * fan_in + eps)
    return (w - mean) * scale


def flatten_conv_weight(w):
    """(Cout, Cin, kh, kw) -> (kh*kw*Cin, Cout), matching im2col patch order."""
    cout = w.shape[0]
    return jnp.transpose(w, (2, 3, 1, 0)).reshape(-1, cout)


def _pad2d(a, rows, cols):
    return jnp.pad(a, ((0, rows - a.shape[0]), (0, cols - a.shape[1])))


def _pad_bias(b, n):
    return jnp.pad(b, (0, n - b.shape[0])).reshape(1, n).astype(jnp.float32)


def im2col(x, kh, kw, stride, pad):
    """x: NHWC -> (B, Ho*Wo, kh*kw*C) patches, plus output spatial dims.

    TODO(synk): at full resolution, gather the kh*kw shifted slabs inside the
    kernel via pl.ds from a padded NHWC input instead of materializing the
    patch matrix in HBM.
    """
    x = jnp.pad(x, ((0, 0), (pad, pad), (pad, pad), (0, 0)))
    B, H, W, C = x.shape
    Ho = (H - kh) // stride + 1
    Wo = (W - kw) // stride + 1
    cols = []
    for i in range(kh):
        for j in range(kw):
            cols.append(x[:, i:i + stride * Ho:stride,
                          j:j + stride * Wo:stride, :])
    patches = jnp.concatenate(cols, axis=-1)           # (B, Ho, Wo, kh*kw*C)
    return patches.reshape(B, Ho * Wo, kh * kw * C), (Ho, Wo)


# ----------------------------------------------------------------------------
# Parameters (deterministic, synthetic) and forward pass
# ----------------------------------------------------------------------------
def init_params(key, *, in_ch=3, stem_ch=32, n_features=64, num_classes=11):
    keys = jax.random.split(key, 8)

    def normal(k, shape, scale=0.05):
        return scale * jax.random.normal(k, shape, dtype=jnp.float32)

    return dict(
        stem_w=normal(keys[0], (stem_ch, in_ch, 3, 3)),
        stem_g=jnp.ones((stem_ch,), jnp.float32),
        stem_b=jnp.zeros((stem_ch,), jnp.float32),
        blk_w1=normal(keys[1], (stem_ch, stem_ch, 1, 1)),
        blk_g1=jnp.ones((stem_ch,), jnp.float32),
        blk_b1=jnp.zeros((stem_ch,), jnp.float32),
        blk_w2=normal(keys[2], (stem_ch, stem_ch, 1, 1)),
        blk_g2=jnp.ones((stem_ch,), jnp.float32),
        blk_b2=jnp.zeros((stem_ch,), jnp.float32),
        final_w=normal(keys[3], (n_features, stem_ch, 1, 1)),
        final_g=jnp.ones((n_features,), jnp.float32),
        final_b=jnp.zeros((n_features,), jnp.float32),
        fc_w=normal(keys[4], (num_classes, n_features)),   # PyTorch Linear layout
        fc_b=jnp.zeros((num_classes,), jnp.float32),
    )


def custom_nfnet_forward(x_nchw, params, *, alpha=0.2):
    # layout: x_nchw is (B, C, H, W) like PyTorch; transpose to NHWC for TPU.
    x = jnp.transpose(x_nchw, (0, 2, 3, 1)).astype(jnp.float32)

    # --- stem im2col (3x3 stride 2 pad 1); emit bf16 patches -----------------
    cols, (Ho, Wo) = im2col(x, 3, 3, 2, 1)
    B, HW, K = cols.shape

    # padded, lane-dense widths
    Kp = _round_up(K, 32)
    C = params['stem_w'].shape[0]
    Cp = _round_up(C, LANE)
    F = params['final_w'].shape[0]
    Fp = _round_up(F, LANE)
    num_classes = params['fc_w'].shape[0]
    Np = _round_up(num_classes, LANE)

    cols = jnp.pad(cols, ((0, 0), (0, 0), (0, Kp - K))).astype(jnp.bfloat16)

    # --- weight standardization + flatten + zero-pad + bf16 cast -------------
    ws = _pad2d(flatten_conv_weight(
        standardize_weight(params['stem_w'], params['stem_g'])),
        Kp, Cp).astype(jnp.bfloat16)
    w1 = _pad2d(flatten_conv_weight(
        standardize_weight(params['blk_w1'], params['blk_g1'])),
        Cp, Cp).astype(jnp.bfloat16)
    w2 = _pad2d(flatten_conv_weight(
        standardize_weight(params['blk_w2'], params['blk_g2'])),
        Cp, Cp).astype(jnp.bfloat16)
    wf = _pad2d(flatten_conv_weight(
        standardize_weight(params['final_w'], params['final_g'])),
        Cp, Fp).astype(jnp.bfloat16)
    fcw = _pad2d(params['fc_w'].T.astype(jnp.float32), Fp, Np)   # keep head f32

    bs = _pad_bias(params['stem_b'], Cp)
    b1 = _pad_bias(params['blk_b1'], Cp)
    b2 = _pad_bias(params['blk_b2'], Cp)
    bfin = _pad_bias(params['final_b'], Fp)
    fcb = _pad_bias(params['fc_b'], Np)

    # --- single fused Pallas kernel: convs + residual + pool + fc ------------
    out = nfnet_fused(cols, ws, bs, w1, b1, w2, b2, wf, bfin, fcw, fcb,
                      alpha=alpha, hw=HW)
    return out[:, :num_classes]                               # (B, num_classes)


if __name__ == "__main__":
    key = jax.random.PRNGKey(0)
    pkey, xkey = jax.random.split(key)

    params = init_params(pkey, in_ch=3, stem_ch=32, n_features=64,
                         num_classes=11)
    x = jax.random.normal(xkey, (2, 3, 16, 16), dtype=jnp.float32)  # NCHW

    out = jax.jit(custom_nfnet_forward)(x, params)
    out = jax.block_until_ready(out)

    assert out.shape == (2, 11), out.shape
    assert jnp.all(jnp.isfinite(out))
    print("KERNEL_OK")
</pallas_src>

<mosaic_0001>
module attributes {stable_mosaic.version = 11 : i64} {
  func.func @_nfnet_fused_kernel(%arg0: i32, %arg1: i32, %arg2: memref<1x64x32xbf16, #tpu.memory_space<vmem>>, %arg3: memref<32x128xbf16, #tpu.memory_space<vmem>>, %arg4: memref<1x128xf32, #tpu.memory_space<vmem>>, %arg5: memref<128x128xbf16, #tpu.memory_space<vmem>>, %arg6: memref<1x128xf32, #tpu.memory_space<vmem>>, %arg7: memref<128x128xbf16, #tpu.memory_space<vmem>>, %arg8: memref<1x128xf32, #tpu.memory_space<vmem>>, %arg9: memref<128x128xbf16, #tpu.memory_space<vmem>>, %arg10: memref<1x128xf32, #tpu.memory_space<vmem>>, %arg11: memref<128x128xf32, #tpu.memory_space<vmem>>, %arg12: memref<1x128xf32, #tpu.memory_space<vmem>>, %arg13: memref<1x1x128xf32, #tpu.memory_space<vmem>>, %arg14: memref<1x128xf32, #tpu.memory_space<vmem>>) attributes {dimension_semantics = [#tpu.dimension_semantics<parallel>, #tpu.dimension_semantics<arbitrary>], iteration_bounds = array<i64: 2, 1>, scalar_prefetch = 0 : i64, scratch_operands = 1 : i64, tpu.core_type = #tpu.core_type<tc>, window_params = [{transform_indices = @transform_0, window_bounds = array<i64: 1, 64, 32>}, {pipeline_mode = #tpu.pipeline_mode<synchronous>, transform_indices = @transform_1, window_bounds = array<i64: 32, 128>}, {pipeline_mode = #tpu.pipeline_mode<synchronous>, transform_indices = @transform_2, window_bounds = array<i64: 1, 128>}, {pipeline_mode = #tpu.pipeline_mode<synchronous>, transform_indices = @transform_3, window_bounds = array<i64: 128, 128>}, {pipeline_mode = #tpu.pipeline_mode<synchronous>, transform_indices = @transform_4, window_bounds = array<i64: 1, 128>}, {pipeline_mode = #tpu.pipeline_mode<synchronous>, transform_indices = @transform_5, window_bounds = array<i64: 128, 128>}, {pipeline_mode = #tpu.pipeline_mode<synchronous>, transform_indices = @transform_6, window_bounds = array<i64: 1, 128>}, {pipeline_mode = #tpu.pipeline_mode<synchronous>, transform_indices = @transform_7, window_bounds = array<i64: 128, 128>}, {pipeline_mode = #tpu.pipeline_mode<synchronous>, transform_indices = @transform_8, window_bounds = array<i64: 1, 128>}, {pipeline_mode = #tpu.pipeline_mode<synchronous>, transform_indices = @transform_9, window_bounds = array<i64: 128, 128>}, {pipeline_mode = #tpu.pipeline_mode<synchronous>, transform_indices = @transform_10, window_bounds = array<i64: 1, 128>}, {transform_indices = @transform_11, window_bounds = array<i64: 1, 1, 128>}]} {
    %c0_i32 = arith.constant 0 : i32
    %0 = arith.cmpi eq, %arg1, %c0_i32 : i32
    %1 = arith.extui %0 : i1 to i32
    %c0_i32_0 = arith.constant 0 : i32
    %2 = arith.cmpi ne, %1, %c0_i32_0 : i32
    scf.if %2 {
      %cst_46 = arith.constant 0.000000e+00 : f32
      %84 = vector.broadcast %cst_46 : f32 to vector<1x128xf32>
      %c0_47 = arith.constant 0 : index
      %c0_48 = arith.constant 0 : index
      %85 = vector.load %arg14[%c0_47, %c0_48] : memref<1x128xf32, #tpu.memory_space<vmem>>, vector<1x128xf32>
      tpu.vector_store %arg14[%c0_47, %c0_48], %84 {strides = array<i32>} : memref<1x128xf32, #tpu.memory_space<vmem>>, vector<1x128xf32>,
    } else {
    }
    %c0 = arith.constant 0 : index
    %c0_1 = arith.constant 0 : index
    %c0_2 = arith.constant 0 : index
    %3 = vector.load %arg2[%c0, %c0_1, %c0_2] : memref<1x64x32xbf16, #tpu.memory_space<vmem>>, vector<1x64x32xbf16>
    %4 = vector.shape_cast %3 : vector<1x64x32xbf16> to vector<64x32xbf16>
    %c0_3 = arith.constant 0 : index
    %c0_4 = arith.constant 0 : index
    %5 = vector.load %arg3[%c0_3, %c0_4] : memref<32x128xbf16, #tpu.memory_space<vmem>>, vector<32x128xbf16>
    %cst = arith.constant dense<0.000000e+00> : vector<64x128xf32>
    %6 = tpu.matmul %4, %5, %cst {dimension_numbers = #tpu.dot_dimension_numbers<[1], [0], [0], [1], [0, 0, 1, 1], [], []>} : vector<64x32xbf16>, vector<32x128xbf16>, vector<64x128xf32> -> vector<64x128xf32>
    %c0_5 = arith.constant 0 : index
    %c0_6 = arith.constant 0 : index
    %7 = vector.load %arg4[%c0_5, %c0_6] : memref<1x128xf32, #tpu.memory_space<vmem>>, vector<1x128xf32>
    %8 = vector.broadcast %7 : vector<1x128xf32> to vector<64x128xf32>
    %9 = arith.addf %6, %8 : vector<64x128xf32>
    %10 = arith.mulf %9, %9 : vector<64x128xf32>
    %11 = arith.mulf %9, %10 : vector<64x128xf32>
    %cst_7 = arith.constant 4.471500e-02 : f32
    %12 = vector.broadcast %cst_7 : f32 to vector<64x128xf32>
    %13 = arith.mulf %12, %11 : vector<64x128xf32>
    %14 = arith.addf %9, %13 : vector<64x128xf32>
    %cst_8 = arith.constant 0.797884583 : f32
    %15 = vector.broadcast %cst_8 : f32 to vector<64x128xf32>
    %16 = arith.mulf %15, %14 : vector<64x128xf32>
    %17 = math.tanh %16 : vector<64x128xf32>
    %cst_9 = arith.constant 1.000000e+00 : f32
    %18 = vector.broadcast %cst_9 : f32 to vector<64x128xf32>
    %19 = arith.addf %18, %17 : vector<64x128xf32>
    %cst_10 = arith.constant 5.000000e-01 : f32
    %20 = vector.broadcast %cst_10 : f32 to vector<64x128xf32>
    %21 = arith.mulf %20, %19 : vector<64x128xf32>
    %22 = arith.mulf %9, %21 : vector<64x128xf32>
    %cst_11 = arith.constant 1.70150435 : f32
    %23 = vector.broadcast %cst_11 : f32 to vector<64x128xf32>
    %24 = arith.mulf %23, %22 : vector<64x128xf32>
    %25 = arith.truncf %24 : vector<64x128xf32> to vector<64x128xbf16>
    %c0_12 = arith.constant 0 : index
    %c0_13 = arith.constant 0 : index
    %26 = vector.load %arg5[%c0_12, %c0_13] : memref<128x128xbf16, #tpu.memory_space<vmem>>, vector<128x128xbf16>
    %cst_14 = arith.constant dense<0.000000e+00> : vector<64x128xf32>
    %27 = tpu.matmul %25, %26, %cst_14 {dimension_numbers = #tpu.dot_dimension_numbers<[1], [0], [0], [1], [0, 0, 1, 1], [], []>} : vector<64x128xbf16>, vector<128x128xbf16>, vector<64x128xf32> -> vector<64x128xf32>
    %c0_15 = arith.constant 0 : index
    %c0_16 = arith.constant 0 : index
    %28 = vector.load %arg6[%c0_15, %c0_16] : memref<1x128xf32, #tpu.memory_space<vmem>>, vector<1x128xf32>
    %29 = vector.broadcast %28 : vector<1x128xf32> to vector<64x128xf32>
    %30 = arith.addf %27, %29 : vector<64x128xf32>
    %31 = arith.mulf %30, %30 : vector<64x128xf32>
    %32 = arith.mulf %30, %31 : vector<64x128xf32>
    %cst_17 = arith.constant 4.471500e-02 : f32
    %33 = vector.broadcast %cst_17 : f32 to vector<64x128xf32>
    %34 = arith.mulf %33, %32 : vector<64x128xf32>
    %35 = arith.addf %30, %34 : vector<64x128xf32>
    %cst_18 = arith.constant 0.797884583 : f32
    %36 = vector.broadcast %cst_18 : f32 to vector<64x128xf32>
    %37 = arith.mulf %36, %35 : vector<64x128xf32>
    %38 = math.tanh %37 : vector<64x128xf32>
    %cst_19 = arith.constant 1.000000e+00 : f32
    %39 = vector.broadcast %cst_19 : f32 to vector<64x128xf32>
    %40 = arith.addf %39, %38 : vector<64x128xf32>
    %cst_20 = arith.constant 5.000000e-01 : f32
    %41 = vector.broadcast %cst_20 : f32 to vector<64x128xf32>
    %42 = arith.mulf %41, %40 : vector<64x128xf32>
    %43 = arith.mulf %30, %42 : vector<64x128xf32>
    %cst_21 = arith.constant 1.70150435 : f32
    %44 = vector.broadcast %cst_21 : f32 to vector<64x128xf32>
    %45 = arith.mulf %44, %43 : vector<64x128xf32>
    %46 = arith.truncf %45 : vector<64x128xf32> to vector<64x128xbf16>
    %c0_22 = arith.constant 0 : index
    %c0_23 = arith.constant 0 : index
    %47 = vector.load %arg7[%c0_22, %c0_23] : memref<128x128xbf16, #tpu.memory_space<vmem>>, vector<128x128xbf16>
    %cst_24 = arith.constant dense<0.000000e+00> : vector<64x128xf32>
    %48 = tpu.matmul %46, %47, %cst_24 {dimension_numbers = #tpu.dot_dimension_numbers<[1], [0], [0], [1], [0, 0, 1, 1], [], []>} : vector<64x128xbf16>, vector<128x128xbf16>, vector<64x128xf32> -> vector<64x128xf32>
    %c0_25 = arith.constant 0 : index
    %c0_26 = arith.constant 0 : index
    %49 = vector.load %arg8[%c0_25, %c0_26] : memref<1x128xf32, #tpu.memory_space<vmem>>, vector<1x128xf32>
    %50 = vector.broadcast %49 : vector<1x128xf32> to vector<64x128xf32>
    %51 = arith.addf %48, %50 : vector<64x128xf32>
    %cst_27 = arith.constant 2.000000e-01 : f32
    %52 = vector.broadcast %cst_27 : f32 to vector<64x128xf32>
    %53 = arith.mulf %52, %51 : vector<64x128xf32>
    %54 = arith.addf %24, %53 : vector<64x128xf32>
    %55 = arith.truncf %54 : vector<64x128xf32> to vector<64x128xbf16>
    %c0_28 = arith.constant 0 : index
    %c0_29 = arith.constant 0 : index
    %56 = vector.load %arg9[%c0_28, %c0_29] : memref<128x128xbf16, #tpu.memory_space<vmem>>, vector<128x128xbf16>
    %cst_30 = arith.constant dense<0.000000e+00> : vector<64x128xf32>
    %57 = tpu.matmul %55, %56, %cst_30 {dimension_numbers = #tpu.dot_dimension_numbers<[1], [0], [0], [1], [0, 0, 1, 1], [], []>} : vector<64x128xbf16>, vector<128x128xbf16>, vector<64x128xf32> -> vector<64x128xf32>
    %c0_31 = arith.constant 0 : index
    %c0_32 = arith.constant 0 : index
    %58 = vector.load %arg10[%c0_31, %c0_32] : memref<1x128xf32, #tpu.memory_space<vmem>>, vector<1x128xf32>
    %59 = vector.broadcast %58 : vector<1x128xf32> to vector<64x128xf32>
    %60 = arith.addf %57, %59 : vector<64x128xf32>
    %61 = arith.mulf %60, %60 : vector<64x128xf32>
    %62 = arith.mulf %60, %61 : vector<64x128xf32>
    %cst_33 = arith.constant 4.471500e-02 : f32
    %63 = vector.broadcast %cst_33 : f32 to vector<64x128xf32>
    %64 = arith.mulf %63, %62 : vector<64x128xf32>
    %65 = arith.addf %60, %64 : vector<64x128xf32>
    %cst_34 = arith.constant 0.797884583 : f32
    %66 = vector.broadcast %cst_34 : f32 to vector<64x128xf32>
    %67 = arith.mulf %66, %65 : vector<64x128xf32>
    %68 = math.tanh %67 : vector<64x128xf32>
    %cst_35 = arith.constant 1.000000e+00 : f32
    %69 = vector.broadcast %cst_35 : f32 to vector<64x128xf32>
    %70 = arith.addf %69, %68 : vector<64x128xf32>
    %cst_36 = arith.constant 5.000000e-01 : f32
    %71 = vector.broadcast %cst_36 : f32 to vector<64x128xf32>
    %72 = arith.mulf %71, %70 : vector<64x128xf32>
    %73 = arith.mulf %60, %72 : vector<64x128xf32>
    %cst_37 = arith.constant 1.70150435 : f32
    %74 = vector.broadcast %cst_37 : f32 to vector<64x128xf32>
    %75 = arith.mulf %74, %73 : vector<64x128xf32>
    %cst_38 = arith.constant 1.000000e+00 : f32
    %76 = vector.broadcast %cst_38 : f32 to vector<1x64xf32>
    %c0_39 = arith.constant 0 : index
    %c0_40 = arith.constant 0 : index
    %77 = vector.load %arg14[%c0_39, %c0_40] : memref<1x128xf32, #tpu.memory_space<vmem>>, vector<1x128xf32>
    %cst_41 = arith.constant dense<0.000000e+00> : vector<1x128xf32>
    %78 = tpu.matmul %76, %75, %cst_41 {dimension_numbers = #tpu.dot_dimension_numbers<[1], [0], [0], [1], [0, 0, 1, 1], [], []>} : vector<1x64xf32>, vector<64x128xf32>, vector<1x128xf32> -> vector<1x128xf32>
    %79 = arith.addf %77, %78 : vector<1x128xf32>
    %c0_42 = arith.constant 0 : index
    %c0_43 = arith.constant 0 : index
    %80 = vector.load %arg14[%c0_42, %c0_43] : memref<1x128xf32, #tpu.memory_space<vmem>>, vector<1x128xf32>
    tpu.vector_store %arg14[%c0_42, %c0_43], %79 {strides = array<i32>} : memref<1x128xf32, #tpu.memory_space<vmem>>, vector<1x128xf32>,
    %c0_i32_44 = arith.constant 0 : i32
    %81 = arith.cmpi eq, %arg1, %c0_i32_44 : i32
    %82 = arith.extui %81 : i1 to i32
    %c0_i32_45 = arith.constant 0 : i32
    %83 = arith.cmpi ne, %82, %c0_i32_45 : i32
    scf.if %83 {
      %c0_46 = arith.constant 0 : index
      %c0_47 = arith.constant 0 : index
      %84 = vector.load %arg14[%c0_46, %c0_47] : memref<1x128xf32, #tpu.memory_space<vmem>>, vector<1x128xf32>
      %cst_48 = arith.constant 1.562500e-02 : f32
      %85 = vector.broadcast %cst_48 : f32 to vector<1x128xf32>
      %86 = arith.mulf %84, %85 : vector<1x128xf32>
      %c0_49 = arith.constant 0 : index
      %c0_50 = arith.constant 0 : index
      %87 = vector.load %arg11[%c0_49, %c0_50] : memref<128x128xf32, #tpu.memory_space<vmem>>, vector<128x128xf32>
      %cst_51 = arith.constant dense<0.000000e+00> : vector<1x128xf32>
      %88 = tpu.matmul %86, %87, %cst_51 {dimension_numbers = #tpu.dot_dimension_numbers<[1], [0], [0], [1], [0, 0, 1, 1], [], []>} : vector<1x128xf32>, vector<128x128xf32>, vector<1x128xf32> -> vector<1x128xf32>
      %c0_52 = arith.constant 0 : index
      %c0_53 = arith.constant 0 : index
      %89 = vector.load %arg12[%c0_52, %c0_53] : memref<1x128xf32, #tpu.memory_space<vmem>>, vector<1x128xf32>
      %90 = arith.addf %88, %89 : vector<1x128xf32>
      %c0_54 = arith.constant 0 : index
      %c0_55 = arith.constant 0 : index
      %c0_56 = arith.constant 0 : index
      %91 = vector.load %arg13[%c0_54, %c0_55, %c0_56] : memref<1x1x128xf32, #tpu.memory_space<vmem>>, vector<1x1x128xf32>
      %92 = vector.shape_cast %91 : vector<1x1x128xf32> to vector<1x128xf32>
      %93 = vector.shape_cast %90 : vector<1x128xf32> to vector<1x1x128xf32>
      tpu.vector_store %arg13[%c0_54, %c0_55, %c0_56], %93 {strides = array<i32>} : memref<1x1x128xf32, #tpu.memory_space<vmem>>, vector<1x1x128xf32>,
    } else {
    }
    return
  }
  func.func @transform_0(%arg0: i32, %arg1: i32) -> (i32, i32, i32) {
    %c0_i32 = arith.constant 0 : i32
    %c0_i32_0 = arith.constant 0 : i32
    return %arg0, %arg1, %c0_i32 : i32, i32, i32
  }
  func.func @transform_1(%arg0: i32, %arg1: i32) -> (i32, i32) {
    %c0_i32 = arith.constant 0 : i32
    %c0_i32_0 = arith.constant 0 : i32
    %c0_i32_1 = arith.constant 0 : i32
    return %c0_i32, %c0_i32_0 : i32, i32
  }
  func.func @transform_2(%arg0: i32, %arg1: i32) -> (i32, i32) {
    %c0_i32 = arith.constant 0 : i32
    %c0_i32_0 = arith.constant 0 : i32
    %c0_i32_1 = arith.constant 0 : i32
    return %c0_i32, %c0_i32_0 : i32, i32
  }
  func.func @transform_3(%arg0: i32, %arg1: i32) -> (i32, i32) {
    %c0_i32 = arith.constant 0 : i32
    %c0_i32_0 = arith.constant 0 : i32
    %c0_i32_1 = arith.constant 0 : i32
    return %c0_i32, %c0_i32_0 : i32, i32
  }
  func.func @transform_4(%arg0: i32, %arg1: i32) -> (i32, i32) {
    %c0_i32 = arith.constant 0 : i32
    %c0_i32_0 = arith.constant 0 : i32
    %c0_i32_1 = arith.constant 0 : i32
    return %c0_i32, %c0_i32_0 : i32, i32
  }
  func.func @transform_5(%arg0: i32, %arg1: i32) -> (i32, i32) {
    %c0_i32 = arith.constant 0 : i32
    %c0_i32_0 = arith.constant 0 : i32
    %c0_i32_1 = arith.constant 0 : i32
    return %c0_i32, %c0_i32_0 : i32, i32
  }
  func.func @transform_6(%arg0: i32, %arg1: i32) -> (i32, i32) {
    %c0_i32 = arith.constant 0 : i32
    %c0_i32_0 = arith.constant 0 : i32
    %c0_i32_1 = arith.constant 0 : i32
    return %c0_i32, %c0_i32_0 : i32, i32
  }
  func.func @transform_7(%arg0: i32, %arg1: i32) -> (i32, i32) {
    %c0_i32 = arith.constant 0 : i32
    %c0_i32_0 = arith.constant 0 : i32
    %c0_i32_1 = arith.constant 0 : i32
    return %c0_i32, %c0_i32_0 : i32, i32
  }
  func.func @transform_8(%arg0: i32, %arg1: i32) -> (i32, i32) {
    %c0_i32 = arith.constant 0 : i32
    %c0_i32_0 = arith.constant 0 : i32
    %c0_i32_1 = arith.constant 0 : i32
    return %c0_i32, %c0_i32_0 : i32, i32
  }
  func.func @transform_9(%arg0: i32, %arg1: i32) -> (i32, i32) {
    %c0_i32 = arith.constant 0 : i32
    %c0_i32_0 = arith.constant 0 : i32
    %c0_i32_1 = arith.constant 0 : i32
    return %c0_i32, %c0_i32_0 : i32, i32
  }
  func.func @transform_10(%arg0: i32, %arg1: i32) -> (i32, i32) {
    %c0_i32 = arith.constant 0 : i32
    %c0_i32_0 = arith.constant 0 : i32
    %c0_i32_1 = arith.constant 0 : i32
    return %c0_i32, %c0_i32_0 : i32, i32
  }
  func.func @transform_11(%arg0: i32, %arg1: i32) -> (i32, i32, i32) {
    %c0_i32 = arith.constant 0 : i32
    %c0_i32_0 = arith.constant 0 : i32
    %c0_i32_1 = arith.constant 0 : i32
    return %arg0, %c0_i32, %c0_i32_0 : i32, i32, i32
  }
}

</mosaic_0001>

<llo_original>
// kernel: custom_nfnet_forward.1
$region0: #{custom_nfnet_forward.1}
  #allocation0 [shape = 'u32[]', space=smem, size = 0x4, offset = 0x4, fixed_abs, tag = 'smem constant byte address 0x4 - core index']
  #allocation1 [shape = 'u32[72,128]{1,0:T(1,128)}', space=vmem, size = 0x9000, scoped, tag = 'internal scratch']
  #allocation2 [shape = 'f32[1,128]{1,0:T(1,128)}', space=vmem, size = 0x200, scoped, tag = 'scratch operand']
  %s0 = inlined_call_operand.vmem [shape: bf16[2,64,32], index: 0, kind: input, shape index: {}]
  %s1 = inlined_call_operand.vmem [shape: bf16[32,128], index: 1, kind: input, shape index: {}]
  %s2 = inlined_call_operand.vmem [shape: f32[1,128], index: 2, kind: input, shape index: {}]
  %s3 = inlined_call_operand.vmem [shape: bf16[128,128], index: 3, kind: input, shape index: {}]
  %s4 = inlined_call_operand.vmem [shape: f32[1,128], index: 4, kind: input, shape index: {}]
  %s5 = inlined_call_operand.vmem [shape: bf16[128,128], index: 5, kind: input, shape index: {}]
  %s6 = inlined_call_operand.vmem [shape: f32[1,128], index: 6, kind: input, shape index: {}]
  %s7 = inlined_call_operand.vmem [shape: bf16[128,128], index: 7, kind: input, shape index: {}]
  %s8 = inlined_call_operand.vmem [shape: f32[1,128], index: 8, kind: input, shape index: {}]
  %s9 = inlined_call_operand.vmem [shape: f32[128,128], index: 9, kind: input, shape index: {}]
  %s10 = inlined_call_operand.vmem [shape: f32[1,128], index: 10, kind: input, shape index: {}]
  %s11 = inlined_call_operand.hbm [shape: f32[2,1,128], index: 11, kind: output, shape index: {}]
  %s12 = sld [smem:[#allocation0]]
  $region85: #{custom_nfnet_forward.1} parent=0
    _
  %s14 = ssub.s32 1, %s12
  %s15 = scalar_select 0, %s14, %s12
  $region1: #{custom_nfnet_forward.1} parent=0
    #allocation3 [shape = 'u8[1024]{0}', space=vmem, size = 0x400, scoped, tag = 'output window, operand 0']
    #allocation4 [shape = 's32[2]{0}', space=sflag, size = 0x8, scoped, tag = 'scoped memory for custom_nfnet_forward.1']
    %16 = vsyncpa [#allocation4], 0
    %s17 = scalar_lea.sflag [#allocation4], 1
    %18 = vsyncpa %s17, 0
    loop: start=0, step=1, limit=4
    $region2: #{custom_nfnet_forward.1} parent=1 // loop_pre_header
      _
    $region3: #{custom_nfnet_forward.1} parent=1 // loop_header
      %s20 = sphi 0, %s24
      %p21 = scmp.ge.s32.totalorder %s20, 4
      %s27 = sphi 0, %s39
      %s28 = sphi 0, %s35
      %s29 = sphi 0, %s27
      %s30 = sphi 0, %s28
      %s31 = sphi 0, %s29
      %s32 = sphi 0, %s30
      %s44 = sphi 0, %s46
      %s47 = sphi 0, %s44
      %s48 = sphi 0, %s47
      %s64 = sphi 0, %s48
      %s68 = sphi 0, %s68
      %s70 = sphi 0, %s68
      %s71 = sphi 0, %s70
      %s85 = sphi 0, %s71
      %s89 = sphi 0, %s89
      %s91 = sphi 0, %s89
      %s92 = sphi 0, %s91
      %s106 = sphi 0, %s92
      %s110 = sphi 0, %s110
      %s112 = sphi 0, %s110
      %s113 = sphi 0, %s112
      %s127 = sphi 0, %s113
      %s131 = sphi 0, %s131
      %s133 = sphi 0, %s131
      %s134 = sphi 0, %s133
      %s148 = sphi 0, %s134
      %s152 = sphi 0, %s152
      %s154 = sphi 0, %s152
      %s155 = sphi 0, %s154
      %s169 = sphi 0, %s155
      %s173 = sphi 0, %s173
      %s175 = sphi 0, %s173
      %s176 = sphi 0, %s175
      %s190 = sphi 0, %s176
      %s194 = sphi 0, %s194
      %s196 = sphi 0, %s194
      %s197 = sphi 0, %s196
      %s211 = sphi 0, %s197
      %s215 = sphi 0, %s215
      %s217 = sphi 0, %s215
      %s218 = sphi 0, %s217
      %s232 = sphi 0, %s218
      %s236 = sphi 0, %s236
      %s238 = sphi 0, %s236
      %s239 = sphi 0, %s238
      %s253 = sphi 0, %s239
      %s257 = sphi 0, %s257
      %s259 = sphi 0, %s257
      %s260 = sphi 0, %s259
      %s274 = sphi 0, %s260
      %s280 = sphi 0, %s282
      %s283 = sphi 0, %s280
      %s284 = sphi 0, %s283
      %s300 = sphi 0, %s284
    $region4: #{custom_nfnet_forward.1} parent=1 // loop_header_branch
      %23 = sbr.rel (%p21) target = $region8
    $region5: #{custom_nfnet_forward.1} parent=1 // loop_body
      %s25 = ssub.s32 %s20, 1
      %s26 = ssub.s32 %s20, 2
      %s33 = sadd.s32 1, %s28
      %p34 = scmp.ge.s32.totalorder %s33, 1
      %s35 = scalar_select %p34, 0, %s33
      %s36 = sadd.s32 1, %s27
      %s37 = scalar_select %p34, %s36, %s27
      %p38 = scmp.ge.s32.totalorder %s37, 2
      %s39 = scalar_select %p38, 0, %s37
      %s40 = ssub.s32 %s27, %s39
      %s41 = ssub.s32 %s28, %s35
      %s42 = sor.u32 %s40, %s41
      %p43 = scmp.eq.s32.totalorder %s42, 0
      %s45 = sadd.s32 %s44, 1
      %s46 = scalar_select %p43, %s44, %s45
      %p49 = pneg %p43
      %p50 = scmp.eq.s32.totalorder %s20, 1
      %p51 = por %p49, %p50
      %p52 = scmp.ne.s32.totalorder %s44, %s47
      %p53 = scmp.eq.s32.totalorder %s20, 0
      %p54 = por %p52, %p53
      %p55 = scmp.ne.s32.totalorder %s44, %s47
      %p56 = scmp.eq.s32.totalorder %s25, 1
      %p57 = por %p55, %p56
      %p58 = scmp.ne.s32.totalorder %s47, %s48
      %p59 = scmp.eq.s32.totalorder %s25, 0
      %p60 = por %p58, %p59
      %p61 = scmp.ne.s32.totalorder %s47, %s48
      %p62 = scmp.eq.s32.totalorder %s26, 1
      %p63 = por %p61, %p62
      %p65 = scmp.ne.s32.totalorder %s48, %s64
      %p66 = scmp.eq.s32.totalorder %s26, 0
      %p67 = por %p65, %p66
      %s69 = sadd.s32 %s68, 1
      %p72 = scmp.eq.s32.totalorder %s20, 1
      %p73 = scmp.ne.s32.totalorder %s68, %s70
      %p74 = scmp.eq.s32.totalorder %s20, 0
      %p75 = por %p73, %p74
      %p76 = scmp.ne.s32.totalorder %s68, %s70
      %p77 = scmp.eq.s32.totalorder %s25, 1
      %p78 = por %p76, %p77
      %p79 = scmp.ne.s32.totalorder %s70, %s71
      %p80 = scmp.eq.s32.totalorder %s25, 0
      %p81 = por %p79, %p80
      %p82 = scmp.ne.s32.totalorder %s70, %s71
      %p83 = scmp.eq.s32.totalorder %s26, 1
      %p84 = por %p82, %p83
      %p86 = scmp.ne.s32.totalorder %s71, %s85
      %p87 = scmp.eq.s32.totalorder %s26, 0
      %p88 = por %p86, %p87
      %s90 = sadd.s32 %s89, 1
      %p93 = scmp.eq.s32.totalorder %s20, 1
      %p94 = scmp.ne.s32.totalorder %s89, %s91
      %p95 = scmp.eq.s32.totalorder %s20, 0
      %p96 = por %p94, %p95
      %p97 = scmp.ne.s32.totalorder %s89, %s91
      %p98 = scmp.eq.s32.totalorder %s25, 1
      %p99 = por %p97, %p98
      %p100 = scmp.ne.s32.totalorder %s91, %s92
      %p101 = scmp.eq.s32.totalorder %s25, 0
      %p102 = por %p100, %p101
      %p103 = scmp.ne.s32.totalorder %s91, %s92
      %p104 = scmp.eq.s32.totalorder %s26, 1
      %p105 = por %p103, %p104
      %p107 = scmp.ne.s32.totalorder %s92, %s106
      %p108 = scmp.eq.s32.totalorder %s26, 0
      %p109 = por %p107, %p108
      %s111 = sadd.s32 %s110, 1
      %p114 = scmp.eq.s32.totalorder %s20, 1
      %p115 = scmp.ne.s32.totalorder %s110, %s112
      %p116 = scmp.eq.s32.totalorder %s20, 0
      %p117 = por %p115, %p116
      %p118 = scmp.ne.s32.totalorder %s110, %s112
      %p119 = scmp.eq.s32.totalorder %s25, 1
      %p120 = por %p118, %p119
      %p121 = scmp.ne.s32.totalorder %s112, %s113
      %p122 = scmp.eq.s32.totalorder %s25, 0
      %p123 = por %p121, %p122
      %p124 = scmp.ne.s32.totalorder %s112, %s113
      %p125 = scmp.eq.s32.totalorder %s26, 1
      %p126 = por %p124, %p125
      %p128 = scmp.ne.s32.totalorder %s113, %s127
      %p129 = scmp.eq.s32.totalorder %s26, 0
      %p130 = por %p128, %p129
      %s132 = sadd.s32 %s131, 1
      %p135 = scmp.eq.s32.totalorder %s20, 1
      %p136 = scmp.ne.s32.totalorder %s131, %s133
      %p137 = scmp.eq.s32.totalorder %s20, 0
      %p138 = por %p136, %p137
      %p139 = scmp.ne.s32.totalorder %s131, %s133
      %p140 = scmp.eq.s32.totalorder %s25, 1
      %p141 = por %p139, %p140
      %p142 = scmp.ne.s32.totalorder %s133, %s134
      %p143 = scmp.eq.s32.totalorder %s25, 0
      %p144 = por %p142, %p143
      %p145 = scmp.ne.s32.totalorder %s133, %s134
      %p146 = scmp.eq.s32.totalorder %s26, 1
      %p147 = por %p145, %p146
      %p149 = scmp.ne.s32.totalorder %s134, %s148
      %p150 = scmp.eq.s32.totalorder %s26, 0
      %p151 = por %p149, %p150
      %s153 = sadd.s32 %s152, 1
      %p156 = scmp.eq.s32.totalorder %s20, 1
      %p157 = scmp.ne.s32.totalorder %s152, %s154
      %p158 = scmp.eq.s32.totalorder %s20, 0
      %p159 = por %p157, %p158
      %p160 = scmp.ne.s32.totalorder %s152, %s154
      %p161 = scmp.eq.s32.totalorder %s25, 1
      %p162 = por %p160, %p161
      %p163 = scmp.ne.s32.totalorder %s154, %s155
      %p164 = scmp.eq.s32.totalorder %s25, 0
      %p165 = por %p163, %p164
      %p166 = scmp.ne.s32.totalorder %s154, %s155
      %p167 = scmp.eq.s32.totalorder %s26, 1
      %p168 = por %p166, %p167
      %p170 = scmp.ne.s32.totalorder %s155, %s169
      %p171 = scmp.eq.s32.totalorder %s26, 0
      %p172 = por %p170, %p171
      %s174 = sadd.s32 %s173, 1
      %p177 = scmp.eq.s32.totalorder %s20, 1
      %p178 = scmp.ne.s32.totalorder %s173, %s175
      %p179 = scmp.eq.s32.totalorder %s20, 0
      %p180 = por %p178, %p179
      %p181 = scmp.ne.s32.totalorder %s173, %s175
      %p182 = scmp.eq.s32.totalorder %s25, 1
      %p183 = por %p181, %p182
      %p184 = scmp.ne.s32.totalorder %s175, %s176
      %p185 = scmp.eq.s32.totalorder %s25, 0
      %p186 = por %p184, %p185
      %p187 = scmp.ne.s32.totalorder %s175, %s176
      %p188 = scmp.eq.s32.totalorder %s26, 1
      %p189 = por %p187, %p188
      %p191 = scmp.ne.s32.totalorder %s176, %s190
      %p192 = scmp.eq.s32.totalorder %s26, 0
      %p193 = por %p191, %p192
      %s195 = sadd.s32 %s194, 1
      %p198 = scmp.eq.s32.totalorder %s20, 1
      %p199 = scmp.ne.s32.totalorder %s194, %s196
      %p200 = scmp.eq.s32.totalorder %s20, 0
      %p201 = por %p199, %p200
      %p202 = scmp.ne.s32.totalorder %s194, %s196
      %p203 = scmp.eq.s32.totalorder %s25, 1
      %p204 = por %p202, %p203
      %p205 = scmp.ne.s32.totalorder %s196, %s197
      %p206 = scmp.eq.s32.totalorder %s25, 0
      %p207 = por %p205, %p206
      %p208 = scmp.ne.s32.totalorder %s196, %s197
      %p209 = scmp.eq.s32.totalorder %s26, 1
      %p210 = por %p208, %p209
      %p212 = scmp.ne.s32.totalorder %s197, %s211
      %p213 = scmp.eq.s32.totalorder %s26, 0
      %p214 = por %p212, %p213
      %s216 = sadd.s32 %s215, 1
      %p219 = scmp.eq.s32.totalorder %s20, 1
      %p220 = scmp.ne.s32.totalorder %s215, %s217
      %p221 = scmp.eq.s32.totalorder %s20, 0
      %p222 = por %p220, %p221
      %p223 = scmp.ne.s32.totalorder %s215, %s217
      %p224 = scmp.eq.s32.totalorder %s25, 1
      %p225 = por %p223, %p224
      %p226 = scmp.ne.s32.totalorder %s217, %s218
      %p227 = scmp.eq.s32.totalorder %s25, 0
      %p228 = por %p226, %p227
      %p229 = scmp.ne.s32.totalorder %s217, %s218
      %p230 = scmp.eq.s32.totalorder %s26, 1
      %p231 = por %p229, %p230
      %p233 = scmp.ne.s32.totalorder %s218, %s232
      %p234 = scmp.eq.s32.totalorder %s26, 0
      %p235 = por %p233, %p234
      %s237 = sadd.s32 %s236, 1
      %p240 = scmp.eq.s32.totalorder %s20, 1
      %p241 = scmp.ne.s32.totalorder %s236, %s238
      %p242 = scmp.eq.s32.totalorder %s20, 0
      %p243 = por %p241, %p242
      %p244 = scmp.ne.s32.totalorder %s236, %s238
      %p245 = scmp.eq.s32.totalorder %s25, 1
      %p246 = por %p244, %p245
      %p247 = scmp.ne.s32.totalorder %s238, %s239
      %p248 = scmp.eq.s32.totalorder %s25, 0
      %p249 = por %p247, %p248
      %p250 = scmp.ne.s32.totalorder %s238, %s239
      %p251 = scmp.eq.s32.totalorder %s26, 1
      %p252 = por %p250, %p251
      %p254 = scmp.ne.s32.totalorder %s239, %s253
      %p255 = scmp.eq.s32.totalorder %s26, 0
      %p256 = por %p254, %p255
      %s258 = sadd.s32 %s257, 1
      %p261 = scmp.eq.s32.totalorder %s20, 1
      %p262 = scmp.ne.s32.totalorder %s257, %s259
      %p263 = scmp.eq.s32.totalorder %s20, 0
      %p264 = por %p262, %p263
      %p265 = scmp.ne.s32.totalorder %s257, %s259
      %p266 = scmp.eq.s32.totalorder %s25, 1
      %p267 = por %p265, %p266
      %p268 = scmp.ne.s32.totalorder %s259, %s260
      %p269 = scmp.eq.s32.totalorder %s25, 0
      %p270 = por %p268, %p269
      %p271 = scmp.ne.s32.totalorder %s259, %s260
      %p272 = scmp.eq.s32.totalorder %s26, 1
      %p273 = por %p271, %p272
      %p275 = scmp.ne.s32.totalorder %s260, %s274
      %p276 = scmp.eq.s32.totalorder %s26, 0
      %p277 = por %p275, %p276
      %s278 = ssub.s32 %s27, %s39
      %p279 = scmp.eq.s32.totalorder %s278, 0
      %s281 = sadd.s32 %s280, 1
      %s282 = scalar_select %p279, %s280, %s281
      %p285 = pneg %p279
      %p286 = scmp.eq.s32.totalorder %s20, 1
      %p287 = por %p285, %p286
      %p288 = scmp.ne.s32.totalorder %s280, %s283
      %p289 = scmp.eq.s32.totalorder %s20, 0
      %p290 = por %p288, %p289
      %p291 = scmp.ne.s32.totalorder %s280, %s283
      %p292 = scmp.eq.s32.totalorder %s25, 1
      %p293 = por %p291, %p292
      %p294 = scmp.ne.s32.totalorder %s283, %s284
      %p295 = scmp.eq.s32.totalorder %s25, 0
      %p296 = por %p294, %p295
      %p297 = scmp.ne.s32.totalorder %s283, %s284
      %p298 = scmp.eq.s32.totalorder %s26, 1
      %p299 = por %p297, %p298
      %p301 = scmp.ne.s32.totalorder %s284, %s300
      %p302 = scmp.eq.s32.totalorder %s26, 0
      %p303 = por %p301, %p302
      %p304 = scmp.le.s32.totalorder 1, %s20
      %p305 = scmp.lt.s32.totalorder %s20, 3
      %p306 = pnand %p304, %p305
      %p307 = pneg %p306
      // Predicated region
      $region9: #{custom_nfnet_forward.1} parent=5 // pred_check
        _
      $region10: #{custom_nfnet_forward.1} parent=5 // pred_check_branch
        %309 = sbr.rel (%p306) target = $region12
      $region11: #{custom_nfnet_forward.1} parent=5 // pred_region
        %s310 = ssub.s32 %s20, 1
        // Predicated region
        $region13: #{custom_nfnet_forward.1} parent=11 // pred_check
          %p311 = pneg %p81
        $region14: #{custom_nfnet_forward.1} parent=11 // pred_check_branch
          %313 = sbr.rel (%p311) target = $region16
        $region15: #{custom_nfnet_forward.1} parent=11 // pred_region
          _
        $region16: #{custom_nfnet_forward.1} parent=11 // pred_fallthru
          _
        // Predicated region
        $region17: #{custom_nfnet_forward.1} parent=11 // pred_check
          %p314 = pneg %p102
        $region18: #{custom_nfnet_forward.1} parent=11 // pred_check_branch
          %316 = sbr.rel (%p314) target = $region20
        $region19: #{custom_nfnet_forward.1} parent=11 // pred_region
          _
        $region20: #{custom_nfnet_forward.1} parent=11 // pred_fallthru
          _
        // Predicated region
        $region21: #{custom_nfnet_forward.1} parent=11 // pred_check
          %p317 = pneg %p123
        $region22: #{custom_nfnet_forward.1} parent=11 // pred_check_branch
          %319 = sbr.rel (%p317) target = $region24
        $region23: #{custom_nfnet_forward.1} parent=11 // pred_region
          _
        $region24: #{custom_nfnet_forward.1} parent=11 // pred_fallthru
          _
        // Predicated region
        $region25: #{custom_nfnet_forward.1} parent=11 // pred_check
          %p320 = pneg %p144
        $region26: #{custom_nfnet_forward.1} parent=11 // pred_check_branch
          %322 = sbr.rel (%p320) target = $region28
        $region27: #{custom_nfnet_forward.1} parent=11 // pred_region
          _
        $region28: #{custom_nfnet_forward.1} parent=11 // pred_fallthru
          _
        // Predicated region
        $region29: #{custom_nfnet_forward.1} parent=11 // pred_check
          %p323 = pneg %p165
        $region30: #{custom_nfnet_forward.1} parent=11 // pred_check_branch
          %325 = sbr.rel (%p323) target = $region32
        $region31: #{custom_nfnet_forward.1} parent=11 // pred_region
          _
        $region32: #{custom_nfnet_forward.1} parent=11 // pred_fallthru
          _
        // Predicated region
        $region33: #{custom_nfnet_forward.1} parent=11 // pred_check
          %p326 = pneg %p186
        $region34: #{custom_nfnet_forward.1} parent=11 // pred_check_branch
          %328 = sbr.rel (%p326) target = $region36
        $region35: #{custom_nfnet_forward.1} parent=11 // pred_region
          _
        $region36: #{custom_nfnet_forward.1} parent=11 // pred_fallthru
          _
        // Predicated region
        $region37: #{custom_nfnet_forward.1} parent=11 // pred_check
          %p329 = pneg %p207
        $region38: #{custom_nfnet_forward.1} parent=11 // pred_check_branch
          %331 = sbr.rel (%p329) target = $region40
        $region39: #{custom_nfnet_forward.1} parent=11 // pred_region
          _
        $region40: #{custom_nfnet_forward.1} parent=11 // pred_fallthru
          _
        // Predicated region
        $region41: #{custom_nfnet_forward.1} parent=11 // pred_check
          %p332 = pneg %p228
        $region42: #{custom_nfnet_forward.1} parent=11 // pred_check_branch
          %334 = sbr.rel (%p332) target = $region44
        $region43: #{custom_nfnet_forward.1} parent=11 // pred_region
          _
        $region44: #{custom_nfnet_forward.1} parent=11 // pred_fallthru
          _
        // Predicated region
        $region45: #{custom_nfnet_forward.1} parent=11 // pred_check
          %p335 = pneg %p249
        $region46: #{custom_nfnet_forward.1} parent=11 // pred_check_branch
          %337 = sbr.rel (%p335) target = $region48
        $region47: #{custom_nfnet_forward.1} parent=11 // pred_region
          _
        $region48: #{custom_nfnet_forward.1} parent=11 // pred_fallthru
          _
        // Predicated region
        $region49: #{custom_nfnet_forward.1} parent=11 // pred_check
          %p338 = pneg %p270
        $region50: #{custom_nfnet_forward.1} parent=11 // pred_check_branch
          %340 = sbr.rel (%p338) target = $region52
        $region51: #{custom_nfnet_forward.1} parent=11 // pred_region
          _
        $region52: #{custom_nfnet_forward.1} parent=11 // pred_fallthru
          _
      $region12: #{custom_nfnet_forward.1} parent=5 // pred_fallthru
        _
      %p341 = scmp.lt.s32.totalorder %s20, 2
      // Predicated region
      $region53: #{custom_nfnet_forward.1} parent=5 // pred_check
        %p342 = pneg %p341
      $region54: #{custom_nfnet_forward.1} parent=5 // pred_check_branch
        %344 = sbr.rel (%p342) target = $region56
      $region55: #{custom_nfnet_forward.1} parent=5 // pred_region
        // Predicated region
        $region57: #{custom_nfnet_forward.1} parent=55 // pred_check
          %p345 = pneg %p54
        $region58: #{custom_nfnet_forward.1} parent=55 // pred_check_branch
          %347 = sbr.rel (%p345) target = $region60
        $region59: #{custom_nfnet_forward.1} parent=55 // pred_region
          %s348 = smul.u32 8, %s28
          %p349 = scmp.lt.s32.totalorder %s27, 1
          %s350 = scalar_select %p349, %s27, 1
          %p351 = scmp.lt.s32.totalorder %s348, 7
          %s352 = scalar_select %p351, %s348, 7
          %s353 = smul.addr %s350, 8
          %s354 = sadd.s32 %s352, %s353
          %s355 = smul.addr %s354, 4
          %s356 = scalar_lea.vmem %s0, %s355
          %s357 = smul.u32 8, %s28
        $region60: #{custom_nfnet_forward.1} parent=55 // pred_fallthru
          _
      $region56: #{custom_nfnet_forward.1} parent=5 // pred_fallthru
        _
      %p358 = scmp.le.s32.totalorder 1, %s20
      %p359 = scmp.lt.s32.totalorder %s20, 3
      %p360 = pnand %p358, %p359
      %p361 = pneg %p360
      // Predicated region
      $region61: #{custom_nfnet_forward.1} parent=5 // pred_check
        _
      $region62: #{custom_nfnet_forward.1} parent=5 // pred_check_branch
        %363 = sbr.rel (%p360) target = $region64
      $region63: #{custom_nfnet_forward.1} parent=5 // pred_region
        %s364 = ssub.s32 %s20, 1
        %s365 = smul.u32 8, %s30
        %p366 = scmp.lt.s32.totalorder %s29, 1
        %s367 = scalar_select %p366, %s29, 1
        %p368 = scmp.lt.s32.totalorder %s365, 7
        %s369 = scalar_select %p368, %s365, 7
        %s370 = smul.addr %s367, 8
        %s371 = sadd.s32 %s369, %s370
        %s372 = smul.addr %s371, 4
        %s373 = scalar_lea.vmem %s0, %s372
        %p374 = pneg %p60
        %p375 = pneg %p57
        %p376 = pneg %p81
        %p377 = pneg %p78
        %p378 = pneg %p102
        %p379 = pneg %p99
        %p380 = pneg %p123
        %p381 = pneg %p120
        %p382 = pneg %p144
        %p383 = pneg %p141
        %p384 = pneg %p165
        %p385 = pneg %p162
        %p386 = pneg %p186
        %p387 = pneg %p183
        %p388 = pneg %p207
        %p389 = pneg %p204
        %p390 = pneg %p228
        %p391 = pneg %p225
        %p392 = pneg %p249
        %p393 = pneg %p246
        %p394 = pneg %p270
        %p395 = pneg %p267
        %p396 = pneg %p296
        %p397 = pneg %p293
        %s398 = sand.u32 %s283, 1
        %s399 = scalar_lea.sflag [#allocation4], %s398
        %s400 = sand.u32 %s283, 1
        %s401 = scalar_lea.vmem [#allocation3], %s400
        %s402 = smul.u32 8, %s30
        %p403 = scmp.lt.s32.totalorder %s29, 1
        %s404 = scalar_select %p403, %s29, 1
        %p405 = scmp.lt.s32.totalorder %s402, 7
        %s406 = scalar_select %p405, %s402, 7
        %s407 = smul.addr %s404, 8
        %s408 = sadd.s32 %s406, %s407
        %s409 = smul.addr %s408, 4
        %s410 = scalar_lea.vmem %s0, %s409
        %s411 = smul.u32 8, %s30
        %p413 = scmp.eq.s32.totalorder %s30, 0
        // Predicated region
        $region65: #{custom_nfnet_forward.1} parent=63 // pred_check
          %p414 = pneg %p413
        $region66: #{custom_nfnet_forward.1} parent=63 // pred_check_branch
          %416 = sbr.rel (%p414) target = $region68
        $region67: #{custom_nfnet_forward.1} parent=63 // pred_region
          %417 = vst [vmem:[#allocation2] sm:$0x1] 0.0
        $region68: #{custom_nfnet_forward.1} parent=63 // pred_fallthru
          _
        %v418 = vld [vmem:[%s410] sm:$0xf]
        %v419 = vld [vmem:[%s410 + $0x4] sm:$0xf]
        %v420 = vld [vmem:[%s410 + $0x8] sm:$0xf]
        %v421 = vld [vmem:[%s410 + $0xc] sm:$0xf]
        %v422 = vld [vmem:[%s410 + $0x10] sm:$0xf]
        %v423 = vld [vmem:[%s410 + $0x14] sm:$0xf]
        %v424 = vld [vmem:[%s410 + $0x18] sm:$0xf]
        %v425 = vld [vmem:[%s410 + $0x1c] sm:$0xf]
        %v426 = vld [vmem:[%s1] sm:$0xf]
        %v427 = vld [vmem:[%s1 + $0x4] sm:$0xf]
        %v428 = vld [vmem:[%s1 + $0x8] sm:$0xf]
        %v429 = vld [vmem:[%s1 + $0xc] sm:$0xf]
        %v430 = vld [vmem:[%s2] sm:$0x1]
        %v432 = vperm.slane %v430, 0
        %v442 = vunpack.c.l.b16 %v418
        %v443 = vunpack.c.l.b16 %v419
        %v444 = vunpack.c.l.b16 %v420
        %v445 = vunpack.c.l.b16 %v421
        %v446 = vunpack.c.l.b16 %v422
        %v447 = vunpack.c.l.b16 %v423
        %v448 = vunpack.c.l.b16 %v424
        %v449 = vunpack.c.l.b16 %v425
        %v450 = vpack.c.b16 %v443, %v442
        %v451 = vpack.c.b16 %v445, %v444
        %v452 = vpack.c.b16 %v447, %v446
        %v453 = vpack.c.b16 %v449, %v448
        %v458 = vunpack.c.l.b16 %v426
        %v459 = vunpack.c.l.b16 %v427
        %v460 = vunpack.c.l.b16 %v428
        %v461 = vunpack.c.l.b16 %v429
        %v462 = vpack.c.b16 %v459, %v458
        %v463 = vpack.c.b16 %v461, %v460
        %vm466 = vcmask 261120
        %v468 = vsel %vm466, %v450, 0
        %v471 = vsel %vm466, %v451, 0
        %v474 = vsel %vm466, %v452, 0
        %v477 = vsel %vm466, %v453, 0
        %479 = vmatpush.bf16.msra.mxu0 0
        %480 = vmatpush.bf16.msra.mxu0 0
        %481 = vmatpush.bf16.msra.mxu0 0
        %482 = vmatpush.bf16.msra.mxu0 0
        %483 = vmatpush.bf16.msra.mxu0 0
        %484 = vmatpush.bf16.msra.mxu0 0
        %485 = vmatpush.bf16.msra.mxu0 %v463
        %486 = vmatpush.bf16.msra.mxu0 %v462
        %487 = vmatmul.bf16.gmra.mxu0 %v468
        %v488 = vpop.f32.mrf.mxu0
        %v489 = vadd.f32 %v432, %v488
        %v490 = vpop.f32.mrf.mxu0
        %v491 = vadd.f32 %v432, %v490
        %492 = vmatmul.bf16.gmra.mxu0 %v471
        %v493 = vpop.f32.mrf.mxu0
        %v494 = vadd.f32 %v432, %v493
        %v495 = vpop.f32.mrf.mxu0
        %v496 = vadd.f32 %v432, %v495
        %497 = vmatmul.bf16.gmra.mxu0 %v474
        %v498 = vpop.f32.mrf.mxu0
        %v499 = vadd.f32 %v432, %v498
        %v500 = vpop.f32.mrf.mxu0
        %v501 = vadd.f32 %v432, %v500
        %502 = vmatmul.bf16.gmra.mxu0 %v477
        %v503 = vpop.f32.mrf.mxu0
        %v504 = vadd.f32 %v432, %v503
        %v505 = vpop.f32.mrf.mxu0
        %v506 = vadd.f32 %v432, %v505
        %507 = vdwg.mxu0
        %v508 = vmul.f32 %v489, %v489
        %v509 = vmul.f32 %v491, %v491
        %v510 = vmul.f32 %v494, %v494
        %v511 = vmul.f32 %v496, %v496
        %v512 = vmul.f32 %v499, %v499
        %v513 = vmul.f32 %v501, %v501
        %v514 = vmul.f32 %v504, %v504
        %v515 = vmul.f32 %v506, %v506
        %v516 = vmul.f32 %v489, %v508
        %v517 = vmul.f32 %v491, %v509
        %v518 = vmul.f32 %v494, %v510
        %v519 = vmul.f32 %v496, %v511
        %v520 = vmul.f32 %v499, %v512
        %v521 = vmul.f32 %v501, %v513
        %v522 = vmul.f32 %v504, %v514
        %v523 = vmul.f32 %v506, %v515
        %v524 = vmul.f32 %v516, 0.044715
        %v525 = vmul.f32 %v517, 0.044715
        %v526 = vmul.f32 %v518, 0.044715
        %v527 = vmul.f32 %v519, 0.044715
        %v528 = vmul.f32 %v520, 0.044715
        %v529 = vmul.f32 %v521, 0.044715
        %v530 = vmul.f32 %v522, 0.044715
        %v531 = vmul.f32 %v523, 0.044715
        %v532 = vadd.f32 %v489, %v524
        %v533 = vadd.f32 %v491, %v525
        %v534 = vadd.f32 %v494, %v526
        %v535 = vadd.f32 %v496, %v527
        %v536 = vadd.f32 %v499, %v528
        %v537 = vadd.f32 %v501, %v529
        %v538 = vadd.f32 %v504, %v530
        %v539 = vadd.f32 %v506, %v531
        %v540 = vmul.f32 %v532, 0.7978846
        %v541 = vmul.f32 %v533, 0.7978846
        %v542 = vmul.f32 %v534, 0.7978846
        %v543 = vmul.f32 %v535, 0.7978846
        %v544 = vmul.f32 %v536, 0.7978846
        %v545 = vmul.f32 %v537, 0.7978846
        %v546 = vmul.f32 %v538, 0.7978846
        %v547 = vmul.f32 %v539, 0.7978846
        %v548 = vtanh.pop %v540
        %v549 = vtanh.pop %v541
        %v550 = vtanh.pop %v542
        %v551 = vtanh.pop %v543
        %v552 = vtanh.pop %v544
        %v553 = vtanh.pop %v545
        %v554 = vtanh.pop %v546
        %v555 = vtanh.pop %v547
        %v556 = vadd.f32 %v548, 1.0
        %v557 = vadd.f32 %v549, 1.0
        %v558 = vadd.f32 %v550, 1.0
        %v559 = vadd.f32 %v551, 1.0
        %v560 = vadd.f32 %v552, 1.0
        %v561 = vadd.f32 %v553, 1.0
        %v562 = vadd.f32 %v554, 1.0
        %v563 = vadd.f32 %v555, 1.0
        %v564 = vmul.f32 %v556, 0.5
        %v565 = vmul.f32 %v557, 0.5
        %v566 = vmul.f32 %v558, 0.5
        %v567 = vmul.f32 %v559, 0.5
        %v568 = vmul.f32 %v560, 0.5
        %v569 = vmul.f32 %v561, 0.5
        %v570 = vmul.f32 %v562, 0.5
        %v571 = vmul.f32 %v563, 0.5
        %v572 = vmul.f32 %v489, %v564
        %v573 = vmul.f32 %v491, %v565
        %v574 = vmul.f32 %v494, %v566
        %v575 = vmul.f32 %v496, %v567
        %v576 = vmul.f32 %v499, %v568
        %v577 = vmul.f32 %v501, %v569
        %v578 = vmul.f32 %v504, %v570
        %v579 = vmul.f32 %v506, %v571
        %v580 = vmul.f32 %v572, 1.7015043
        %v581 = vmul.f32 %v573, 1.7015043
        %v582 = vmul.f32 %v574, 1.7015043
        %v583 = vmul.f32 %v575, 1.7015043
        %v584 = vmul.f32 %v576, 1.7015043
        %v585 = vmul.f32 %v577, 1.7015043
        %v586 = vmul.f32 %v578, 1.7015043
        %v587 = vmul.f32 %v579, 1.7015043
        %v588 = vpack.c.bf16 %v581, %v580
        %v589 = vpack.c.bf16 %v583, %v582
        %v590 = vpack.c.bf16 %v585, %v584
        %v591 = vpack.c.bf16 %v587, %v586
        %v592 = vld [vmem:[%s3] sm:$0xf]
        %v593 = vld [vmem:[%s3 + $0x4] sm:$0xf]
        %v594 = vld [vmem:[%s3 + $0x8] sm:$0xf]
        %v595 = vld [vmem:[%s3 + $0xc] sm:$0xf]
        %v596 = vld [vmem:[%s3 + $0x10] sm:$0xf]
        %v597 = vld [vmem:[%s3 + $0x14] sm:$0xf]
        %v598 = vld [vmem:[%s3 + $0x18] sm:$0xf]
        %v599 = vld [vmem:[%s3 + $0x1c] sm:$0xf]
        %v600 = vld [vmem:[%s3 + $0x20] sm:$0xf]
        %v601 = vld [vmem:[%s3 + $0x24] sm:$0xf]
        %v602 = vld [vmem:[%s3 + $0x28] sm:$0xf]
        %v603 = vld [vmem:[%s3 + $0x2c] sm:$0xf]
        %v604 = vld [vmem:[%s3 + $0x30] sm:$0xf]
        %v605 = vld [vmem:[%s3 + $0x34] sm:$0xf]
        %v606 = vld [vmem:[%s3 + $0x38] sm:$0xf]
        %v607 = vld [vmem:[%s3 + $0x3c] sm:$0xf]
        %v608 = vld [vmem:[%s4] sm:$0x1]
        %v610 = vperm.slane %v608, 0
        %v628 = vunpack.c.l.b16 %v592
        %v629 = vunpack.c.l.b16 %v593
        %v630 = vunpack.c.l.b16 %v594
        %v631 = vunpack.c.l.b16 %v595
        %v632 = vunpack.c.l.b16 %v596
        %v633 = vunpack.c.l.b16 %v597
        %v634 = vunpack.c.l.b16 %v598
        %v635 = vunpack.c.l.b16 %v599
        %v636 = vunpack.c.l.b16 %v600
        %v637 = vunpack.c.l.b16 %v601
        %v638 = vunpack.c.l.b16 %v602
        %v639 = vunpack.c.l.b16 %v603
        %v640 = vunpack.c.l.b16 %v604
        %v641 = vunpack.c.l.b16 %v605
        %v642 = vunpack.c.l.b16 %v606
        %v643 = vunpack.c.l.b16 %v607
        %v644 = vpack.c.b16 %v629, %v628
        %v645 = vpack.c.b16 %v631, %v630
        %v646 = vpack.c.b16 %v633, %v632
        %v647 = vpack.c.b16 %v635, %v634
        %v648 = vpack.c.b16 %v637, %v636
        %v649 = vpack.c.b16 %v639, %v638
        %v650 = vpack.c.b16 %v641, %v640
        %v651 = vpack.c.b16 %v643, %v642
        %660 = vmatpush.bf16.msra.mxu0 %v651
        %661 = vmatpush.bf16.msra.mxu0 %v650
        %662 = vmatpush.bf16.msra.mxu0 %v649
        %663 = vmatpush.bf16.msra.mxu0 %v648
        %664 = vmatpush.bf16.msra.mxu0 %v647
        %665 = vmatpush.bf16.msra.mxu0 %v646
        %666 = vmatpush.bf16.msra.mxu0 %v645
        %667 = vmatpush.bf16.msra.mxu0 %v644
        %668 = vmatmul.bf16.gmra.mxu0 %v588
        %v669 = vpop.f32.mrf.mxu0
        %v670 = vadd.f32 %v610, %v669
        %v671 = vpop.f32.mrf.mxu0
        %v672 = vadd.f32 %v610, %v671
        %673 = vmatmul.bf16.gmra.mxu0 %v589
        %v674 = vpop.f32.mrf.mxu0
        %v675 = vadd.f32 %v610, %v674
        %v676 = vpop.f32.mrf.mxu0
        %v677 = vadd.f32 %v610, %v676
        %678 = vmatmul.bf16.gmra.mxu0 %v590
        %v679 = vpop.f32.mrf.mxu0
        %v680 = vadd.f32 %v610, %v679
        %v681 = vpop.f32.mrf.mxu0
        %v682 = vadd.f32 %v610, %v681
        %683 = vmatmul.bf16.gmra.mxu0 %v591
        %v684 = vpop.f32.mrf.mxu0
        %v685 = vadd.f32 %v610, %v684
        %v686 = vpop.f32.mrf.mxu0
        %v687 = vadd.f32 %v610, %v686
        %688 = vdwg.mxu0
        %v689 = vmul.f32 %v670, %v670
        %v690 = vmul.f32 %v672, %v672
        %v691 = vmul.f32 %v675, %v675
        %v692 = vmul.f32 %v677, %v677
        %v693 = vmul.f32 %v680, %v680
        %v694 = vmul.f32 %v682, %v682
        %v695 = vmul.f32 %v685, %v685
        %v696 = vmul.f32 %v687, %v687
        %v697 = vmul.f32 %v670, %v689
        %v698 = vmul.f32 %v672, %v690
        %v699 = vmul.f32 %v675, %v691
        %v700 = vmul.f32 %v677, %v692
        %v701 = vmul.f32 %v680, %v693
        %v702 = vmul.f32 %v682, %v694
        %v703 = vmul.f32 %v685, %v695
        %v704 = vmul.f32 %v687, %v696
        %v705 = vmul.f32 %v697, 0.044715
        %v706 = vmul.f32 %v698, 0.044715
        %v707 = vmul.f32 %v699, 0.044715
        %v708 = vmul.f32 %v700, 0.044715
        %v709 = vmul.f32 %v701, 0.044715
        %v710 = vmul.f32 %v702, 0.044715
        %v711 = vmul.f32 %v703, 0.044715
        %v712 = vmul.f32 %v704, 0.044715
        %v713 = vadd.f32 %v670, %v705
        %v714 = vadd.f32 %v672, %v706
        %v715 = vadd.f32 %v675, %v707
        %v716 = vadd.f32 %v677, %v708
        %v717 = vadd.f32 %v680, %v709
        %v718 = vadd.f32 %v682, %v710
        %v719 = vadd.f32 %v685, %v711
        %v720 = vadd.f32 %v687, %v712
        %v721 = vmul.f32 %v713, 0.7978846
        %v722 = vmul.f32 %v714, 0.7978846
        %v723 = vmul.f32 %v715, 0.7978846
        %v724 = vmul.f32 %v716, 0.7978846
        %v725 = vmul.f32 %v717, 0.7978846
        %v726 = vmul.f32 %v718, 0.7978846
        %v727 = vmul.f32 %v719, 0.7978846
        %v728 = vmul.f32 %v720, 0.7978846
        %v729 = vtanh.pop %v721
        %v730 = vtanh.pop %v722
        %v731 = vtanh.pop %v723
        %v732 = vtanh.pop %v724
        %v733 = vtanh.pop %v725
        %v734 = vtanh.pop %v726
        %v735 = vtanh.pop %v727
        %v736 = vtanh.pop %v728
        %v737 = vadd.f32 %v729, 1.0
        %v738 = vadd.f32 %v730, 1.0
        %v739 = vadd.f32 %v731, 1.0
        %v740 = vadd.f32 %v732, 1.0
        %v741 = vadd.f32 %v733, 1.0
        %v742 = vadd.f32 %v734, 1.0
        %v743 = vadd.f32 %v735, 1.0
        %v744 = vadd.f32 %v736, 1.0
        %v745 = vmul.f32 %v737, 0.5
        %v746 = vmul.f32 %v738, 0.5
        %v747 = vmul.f32 %v739, 0.5
        %v748 = vmul.f32 %v740, 0.5
        %v749 = vmul.f32 %v741, 0.5
        %v750 = vmul.f32 %v742, 0.5
        %v751 = vmul.f32 %v743, 0.5
        %v752 = vmul.f32 %v744, 0.5
        %v753 = vmul.f32 %v670, %v745
        %v754 = vmul.f32 %v672, %v746
        %v755 = vmul.f32 %v675, %v747
        %v756 = vmul.f32 %v677, %v748
        %v757 = vmul.f32 %v680, %v749
        %v758 = vmul.f32 %v682, %v750
        %v759 = vmul.f32 %v685, %v751
        %v760 = vmul.f32 %v687, %v752
        %v761 = vmul.f32 %v753, 1.7015043
        %v762 = vmul.f32 %v754, 1.7015043
        %v763 = vmul.f32 %v755, 1.7015043
        %v764 = vmul.f32 %v756, 1.7015043
        %v765 = vmul.f32 %v757, 1.7015043
        %v766 = vmul.f32 %v758, 1.7015043
        %v767 = vmul.f32 %v759, 1.7015043
        %v768 = vmul.f32 %v760, 1.7015043
        %v769 = vpack.c.bf16 %v762, %v761
        %v770 = vpack.c.bf16 %v764, %v763
        %v771 = vpack.c.bf16 %v766, %v765
        %v772 = vpack.c.bf16 %v768, %v767
        %v773 = vld [vmem:[%s5] sm:$0xf]
        %v774 = vld [vmem:[%s5 + $0x4] sm:$0xf]
        %v775 = vld [vmem:[%s5 + $0x8] sm:$0xf]
        %v776 = vld [vmem:[%s5 + $0xc] sm:$0xf]
        %v777 = vld [vmem:[%s5 + $0x10] sm:$0xf]
        %v778 = vld [vmem:[%s5 + $0x14] sm:$0xf]
        %v779 = vld [vmem:[%s5 + $0x18] sm:$0xf]
        %v780 = vld [vmem:[%s5 + $0x1c] sm:$0xf]
        %v781 = vld [vmem:[%s5 + $0x20] sm:$0xf]
        %v782 = vld [vmem:[%s5 + $0x24] sm:$0xf]
        %v783 = vld [vmem:[%s5 + $0x28] sm:$0xf]
        %v784 = vld [vmem:[%s5 + $0x2c] sm:$0xf]
        %v785 = vld [vmem:[%s5 + $0x30] sm:$0xf]
        %v786 = vld [vmem:[%s5 + $0x34] sm:$0xf]
        %v787 = vld [vmem:[%s5 + $0x38] sm:$0xf]
        %v788 = vld [vmem:[%s5 + $0x3c] sm:$0xf]
        %v789 = vld [vmem:[%s6] sm:$0x1]
        %v791 = vperm.slane %v789, 0
        %v809 = vunpack.c.l.b16 %v773
        %v810 = vunpack.c.l.b16 %v774
        %v811 = vunpack.c.l.b16 %v775
        %v812 = vunpack.c.l.b16 %v776
        %v813 = vunpack.c.l.b16 %v777
        %v814 = vunpack.c.l.b16 %v778
        %v815 = vunpack.c.l.b16 %v779
        %v816 = vunpack.c.l.b16 %v780
        %v817 = vunpack.c.l.b16 %v781
        %v818 = vunpack.c.l.b16 %v782
        %v819 = vunpack.c.l.b16 %v783
        %v820 = vunpack.c.l.b16 %v784
        %v821 = vunpack.c.l.b16 %v785
        %v822 = vunpack.c.l.b16 %v786
        %v823 = vunpack.c.l.b16 %v787
        %v824 = vunpack.c.l.b16 %v788
        %v825 = vpack.c.b16 %v810, %v809
        %v826 = vpack.c.b16 %v812, %v811
        %v827 = vpack.c.b16 %v814, %v813
        %v828 = vpack.c.b16 %v816, %v815
        %v829 = vpack.c.b16 %v818, %v817
        %v830 = vpack.c.b16 %v820, %v819
        %v831 = vpack.c.b16 %v822, %v821
        %v832 = vpack.c.b16 %v824, %v823
        %841 = vmatpush.bf16.msra.mxu0 %v832
        %842 = vmatpush.bf16.msra.mxu0 %v831
        %843 = vmatpush.bf16.msra.mxu0 %v830
        %844 = vmatpush.bf16.msra.mxu0 %v829
        %845 = vmatpush.bf16.msra.mxu0 %v828
        %846 = vmatpush.bf16.msra.mxu0 %v827
        %847 = vmatpush.bf16.msra.mxu0 %v826
        %848 = vmatpush.bf16.msra.mxu0 %v825
        %849 = vmatmul.bf16.gmra.mxu0 %v769
        %v850 = vpop.f32.mrf.mxu0
        %v851 = vadd.f32 %v791, %v850
        %v852 = vpop.f32.mrf.mxu0
        %v853 = vadd.f32 %v791, %v852
        %854 = vmatmul.bf16.gmra.mxu0 %v770
        %v855 = vpop.f32.mrf.mxu0
        %v856 = vadd.f32 %v791, %v855
        %v857 = vpop.f32.mrf.mxu0
        %v858 = vadd.f32 %v791, %v857
        %859 = vmatmul.bf16.gmra.mxu0 %v771
        %v860 = vpop.f32.mrf.mxu0
        %v861 = vadd.f32 %v791, %v860
        %v862 = vpop.f32.mrf.mxu0
        %v863 = vadd.f32 %v791, %v862
        %864 = vmatmul.bf16.gmra.mxu0 %v772
        %v865 = vpop.f32.mrf.mxu0
        %v866 = vadd.f32 %v791, %v865
        %v867 = vpop.f32.mrf.mxu0
        %v868 = vadd.f32 %v791, %v867
        %869 = vdwg.mxu0
        %v870 = vmul.f32 %v851, 0.2
        %v871 = vmul.f32 %v853, 0.2
        %v872 = vmul.f32 %v856, 0.2
        %v873 = vmul.f32 %v858, 0.2
        %v874 = vmul.f32 %v861, 0.2
        %v875 = vmul.f32 %v863, 0.2
        %v876 = vmul.f32 %v866, 0.2
        %v877 = vmul.f32 %v868, 0.2
        %v878 = vadd.f32 %v580, %v870
        %v879 = vadd.f32 %v581, %v871
        %v880 = vadd.f32 %v582, %v872
        %v881 = vadd.f32 %v583, %v873
        %v882 = vadd.f32 %v584, %v874
        %v883 = vadd.f32 %v585, %v875
        %v884 = vadd.f32 %v586, %v876
        %v885 = vadd.f32 %v587, %v877
        %v886 = vpack.c.bf16 %v879, %v878
        %v887 = vpack.c.bf16 %v881, %v880
        %v888 = vpack.c.bf16 %v883, %v882
        %v889 = vpack.c.bf16 %v885, %v884
        %v890 = vld [vmem:[%s7] sm:$0xf]
        %v891 = vld [vmem:[%s7 + $0x4] sm:$0xf]
        %v892 = vld [vmem:[%s7 + $0x8] sm:$0xf]
        %v893 = vld [vmem:[%s7 + $0xc] sm:$0xf]
        %v894 = vld [vmem:[%s7 + $0x10] sm:$0xf]
        %v895 = vld [vmem:[%s7 + $0x14] sm:$0xf]
        %v896 = vld [vmem:[%s7 + $0x18] sm:$0xf]
        %v897 = vld [vmem:[%s7 + $0x1c] sm:$0xf]
        %v898 = vld [vmem:[%s7 + $0x20] sm:$0xf]
        %v899 = vld [vmem:[%s7 + $0x24] sm:$0xf]
        %v900 = vld [vmem:[%s7 + $0x28] sm:$0xf]
        %v901 = vld [vmem:[%s7 + $0x2c] sm:$0xf]
        %v902 = vld [vmem:[%s7 + $0x30] sm:$0xf]
        %v903 = vld [vmem:[%s7 + $0x34] sm:$0xf]
        %v904 = vld [vmem:[%s7 + $0x38] sm:$0xf]
        %v905 = vld [vmem:[%s7 + $0x3c] sm:$0xf]
        %v906 = vld [vmem:[%s8] sm:$0x1]
        %v908 = vperm.slane %v906, 0
        %v926 = vunpack.c.l.b16 %v890
        %v927 = vunpack.c.l.b16 %v891
        %v928 = vunpack.c.l.b16 %v892
        %v929 = vunpack.c.l.b16 %v893
        %v930 = vunpack.c.l.b16 %v894
        %v931 = vunpack.c.l.b16 %v895
        %v932 = vunpack.c.l.b16 %v896
        %v933 = vunpack.c.l.b16 %v897
        %v934 = vunpack.c.l.b16 %v898
        %v935 = vunpack.c.l.b16 %v899
        %v936 = vunpack.c.l.b16 %v900
        %v937 = vunpack.c.l.b16 %v901
        %v938 = vunpack.c.l.b16 %v902
        %v939 = vunpack.c.l.b16 %v903
        %v940 = vunpack.c.l.b16 %v904
        %v941 = vunpack.c.l.b16 %v905
        %v942 = vpack.c.b16 %v927, %v926
        %v943 = vpack.c.b16 %v929, %v928
        %v944 = vpack.c.b16 %v931, %v930
        %v945 = vpack.c.b16 %v933, %v932
        %v946 = vpack.c.b16 %v935, %v934
        %v947 = vpack.c.b16 %v937, %v936
        %v948 = vpack.c.b16 %v939, %v938
        %v949 = vpack.c.b16 %v941, %v940
        %958 = vmatpush.bf16.msra.mxu0 %v949
        %959 = vmatpush.bf16.msra.mxu0 %v948
        %960 = vmatpush.bf16.msra.mxu0 %v947
        %961 = vmatpush.bf16.msra.mxu0 %v946
        %962 = vmatpush.bf16.msra.mxu0 %v945
        %963 = vmatpush.bf16.msra.mxu0 %v944
        %964 = vmatpush.bf16.msra.mxu0 %v943
        %965 = vmatpush.bf16.msra.mxu0 %v942
        %966 = vmatmul.bf16.gmra.mxu0 %v886
        %v967 = vpop.f32.mrf.mxu0
        %v968 = vadd.f32 %v908, %v967
        %v969 = vpop.f32.mrf.mxu0
        %v970 = vadd.f32 %v908, %v969
        %971 = vmatmul.bf16.gmra.mxu0 %v887
        %v972 = vpop.f32.mrf.mxu0
        %v973 = vadd.f32 %v908, %v972
        %v974 = vpop.f32.mrf.mxu0
        %v975 = vadd.f32 %v908, %v974
        %976 = vmatmul.bf16.gmra.mxu0 %v888
        %v977 = vpop.f32.mrf.mxu0
        %v978 = vadd.f32 %v908, %v977
        %v979 = vpop.f32.mrf.mxu0
        %v980 = vadd.f32 %v908, %v979
        %981 = vmatmul.bf16.gmra.mxu0 %v889
        %v982 = vpop.f32.mrf.mxu0
        %v983 = vadd.f32 %v908, %v982
        %v984 = vpop.f32.mrf.mxu0
        %v985 = vadd.f32 %v908, %v984
        %986 = vdwg.mxu0
        %v987 = vmul.f32 %v968, %v968
        %v988 = vmul.f32 %v970, %v970
        %v989 = vmul.f32 %v973, %v973
        %v990 = vmul.f32 %v975, %v975
        %v991 = vmul.f32 %v978, %v978
        %v992 = vmul.f32 %v980, %v980
        %v993 = vmul.f32 %v983, %v983
        %v994 = vmul.f32 %v985, %v985
        %v995 = vmul.f32 %v968, %v987
        %v996 = vmul.f32 %v970, %v988
        %v997 = vmul.f32 %v973, %v989
        %v998 = vmul.f32 %v975, %v990
        %v999 = vmul.f32 %v978, %v991
        %v1000 = vmul.f32 %v980, %v992
        %v1001 = vmul.f32 %v983, %v993
        %v1002 = vmul.f32 %v985, %v994
        %v1003 = vmul.f32 %v995, 0.044715
        %v1004 = vmul.f32 %v996, 0.044715
        %v1005 = vmul.f32 %v997, 0.044715
        %v1006 = vmul.f32 %v998, 0.044715
        %v1007 = vmul.f32 %v999, 0.044715
        %v1008 = vmul.f32 %v1000, 0.044715
        %v1009 = vmul.f32 %v1001, 0.044715
        %v1010 = vmul.f32 %v1002, 0.044715
        %v1011 = vadd.f32 %v968, %v1003
        %v1012 = vadd.f32 %v970, %v1004
        %v1013 = vadd.f32 %v973, %v1005
        %v1014 = vadd.f32 %v975, %v1006
        %v1015 = vadd.f32 %v978, %v1007
        %v1016 = vadd.f32 %v980, %v1008
        %v1017 = vadd.f32 %v983, %v1009
        %v1018 = vadd.f32 %v985, %v1010
        %v1019 = vmul.f32 %v1011, 0.7978846
        %v1020 = vmul.f32 %v1012, 0.7978846
        %v1021 = vmul.f32 %v1013, 0.7978846
        %v1022 = vmul.f32 %v1014, 0.7978846
        %v1023 = vmul.f32 %v1015, 0.7978846
        %v1024 = vmul.f32 %v1016, 0.7978846
        %v1025 = vmul.f32 %v1017, 0.7978846
        %v1026 = vmul.f32 %v1018, 0.7978846
        %v1027 = vtanh.pop %v1019
        %v1028 = vtanh.pop %v1020
        %v1029 = vtanh.pop %v1021
        %v1030 = vtanh.pop %v1022
        %v1031 = vtanh.pop %v1023
        %v1032 = vtanh.pop %v1024
        %v1033 = vtanh.pop %v1025
        %v1034 = vtanh.pop %v1026
        %v1035 = vadd.f32 %v1027, 1.0
        %v1036 = vadd.f32 %v1028, 1.0
        %v1037 = vadd.f32 %v1029, 1.0
        %v1038 = vadd.f32 %v1030, 1.0
        %v1039 = vadd.f32 %v1031, 1.0
        %v1040 = vadd.f32 %v1032, 1.0
        %v1041 = vadd.f32 %v1033, 1.0
        %v1042 = vadd.f32 %v1034, 1.0
        %v1043 = vmul.f32 %v1035, 0.5
        %v1044 = vmul.f32 %v1036, 0.5
        %v1045 = vmul.f32 %v1037, 0.5
        %v1046 = vmul.f32 %v1038, 0.5
        %v1047 = vmul.f32 %v1039, 0.5
        %v1048 = vmul.f32 %v1040, 0.5
        %v1049 = vmul.f32 %v1041, 0.5
        %v1050 = vmul.f32 %v1042, 0.5
        %v1051 = vmul.f32 %v968, %v1043
        %v1052 = vmul.f32 %v970, %v1044
        %v1053 = vmul.f32 %v973, %v1045
        %v1054 = vmul.f32 %v975, %v1046
        %v1055 = vmul.f32 %v978, %v1047
        %v1056 = vmul.f32 %v980, %v1048
        %v1057 = vmul.f32 %v983, %v1049
        %v1058 = vmul.f32 %v985, %v1050
        %v1059 = vmul.f32 %v1051, 1.7015043
        %v1060 = vmul.f32 %v1052, 1.7015043
        %v1061 = vmul.f32 %v1053, 1.7015043
        %v1062 = vmul.f32 %v1054, 1.7015043
        %v1063 = vmul.f32 %v1055, 1.7015043
        %v1064 = vmul.f32 %v1056, 1.7015043
        %v1065 = vmul.f32 %v1057, 1.7015043
        %v1066 = vmul.f32 %v1058, 1.7015043
        %v1067 = vld [vmem:[#allocation2] sm:$0x1]
        %vm1068 = vcmask 523264
        %v1070 = vsel %vm1068, 1.0, 0
        %1072 = vmatpush.msra.mxu0 0.0
        %1073 = vmatpush.msra.mxu0 0.0
        %1074 = vmatpush.msra.mxu0 0.0
        %1075 = vmatpush.msra.mxu0 0.0
        %1076 = vmatpush.msra.mxu0 0.0
        %1077 = vmatpush.msra.mxu0 0.0
        %1078 = vmatpush.msra.mxu0 0.0
        %1079 = vmatpush.msra.mxu0 0.0
        %1080 = vmatpush.msra.mxu0 %v1066
        %1081 = vmatpush.msra.mxu0 %v1065
        %1082 = vmatpush.msra.mxu0 %v1064
        %1083 = vmatpush.msra.mxu0 %v1063
        %1084 = vmatpush.msra.mxu0 %v1062
        %1085 = vmatpush.msra.mxu0 %v1061
        %1086 = vmatpush.msra.mxu0 %v1060
        %1087 = vmatpush.msra.mxu0 %v1059
        %1088 = vmatmul.f32.gmra.mxu0 %v1070
        %v1089 = vpop.f32.mrf.mxu0
        %v1090 = vadd.f32 0.0, %v1089
        %1091 = vdwg.mxu0
        %v1092 = vadd.f32 %v1067, %v1090
        %1093 = vst [vmem:[#allocation2] sm:$0x1] %v1092
        // Predicated region
        $region69: #{custom_nfnet_forward.1} parent=63 // pred_check
          %p1094 = pneg %p413
        $region70: #{custom_nfnet_forward.1} parent=63 // pred_check_branch
          %1096 = sbr.rel (%p1094) target = $region72
        $region71: #{custom_nfnet_forward.1} parent=63 // pred_region
          %v1097 = vld [vmem:[#allocation2] sm:$0x1]
          %v1098 = vmul.f32 %v1097, 0.015625
          %v1099 = vld [vmem:[%s9] sm:$0xff]
          %v1100 = vld [vmem:[%s9 + $0x8] sm:$0xff]
          %v1101 = vld [vmem:[%s9 + $0x10] sm:$0xff]
          %v1102 = vld [vmem:[%s9 + $0x18] sm:$0xff]
          %v1103 = vld [vmem:[%s9 + $0x20] sm:$0xff]
          %v1104 = vld [vmem:[%s9 + $0x28] sm:$0xff]
          %v1105 = vld [vmem:[%s9 + $0x30] sm:$0xff]
          %v1106 = vld [vmem:[%s9 + $0x38] sm:$0xff]
          %v1107 = vld [vmem:[%s9 + $0x40] sm:$0xff]
          %v1108 = vld [vmem:[%s9 + $0x48] sm:$0xff]
          %v1109 = vld [vmem:[%s9 + $0x50] sm:$0xff]
          %v1110 = vld [vmem:[%s9 + $0x58] sm:$0xff]
          %v1111 = vld [vmem:[%s9 + $0x60] sm:$0xff]
          %v1112 = vld [vmem:[%s9 + $0x68] sm:$0xff]
          %v1113 = vld [vmem:[%s9 + $0x70] sm:$0xff]
          %v1114 = vld [vmem:[%s9 + $0x78] sm:$0xff]
          %v1115 = vld [vmem:[%s10] sm:$0x1]
          %1116 = vmatpush.msra.mxu0 %v1114
          %1117 = vmatpush.msra.mxu0 %v1113
          %1118 = vmatpush.msra.mxu0 %v1112
          %1119 = vmatpush.msra.mxu0 %v1111
          %1120 = vmatpush.msra.mxu0 %v1110
          %1121 = vmatpush.msra.mxu0 %v1109
          %1122 = vmatpush.msra.mxu0 %v1108
          %1123 = vmatpush.msra.mxu0 %v1107
          %1124 = vmatpush.msra.mxu0 %v1106
          %1125 = vmatpush.msra.mxu0 %v1105
          %1126 = vmatpush.msra.mxu0 %v1104
          %1127 = vmatpush.msra.mxu0 %v1103
          %1128 = vmatpush.msra.mxu0 %v1102
          %1129 = vmatpush.msra.mxu0 %v1101
          %1130 = vmatpush.msra.mxu0 %v1100
          %1131 = vmatpush.msra.mxu0 %v1099
          %1132 = vmatmul.f32.gmra.mxu0 %v1098
          %v1133 = vpop.f32.mrf.mxu0
          %v1134 = vadd.f32 %v1115, %v1133
          %1135 = vdwg.mxu0
          %1136 = vst [vmem:[%s401] sm:$0x1] %v1134
        $region72: #{custom_nfnet_forward.1} parent=63 // pred_fallthru
          _
        %s1137 = sand.u32 %s283, 1
        %s1138 = scalar_lea.sflag [#allocation4], %s1137
        %s1139 = sand.u32 %s283, 1
        %s1140 = scalar_lea.vmem [#allocation3], %s1139
        // Predicated region
        $region73: #{custom_nfnet_forward.1} parent=63 // pred_check
          %p1141 = pneg %p293
        $region74: #{custom_nfnet_forward.1} parent=63 // pred_check_branch
          %1143 = sbr.rel (%p1141) target = $region76
        $region75: #{custom_nfnet_forward.1} parent=63 // pred_region
          %1145 = vsyncadd %s1138, 0
          %s1146 = scalar_lea.hbm %s11, %s29
          %s1148 = sshll.u32 %s1140, 4
          %s1149 = int_to_ptr.vmem [resolvable:$true] %s1148
          %s1150 = sshll.u32 %s1146, 4
          %s1151 = int_to_ptr.hbm [resolvable:$true] %s1150
          %1153 = dma.vmem_to_hbm [thread:$0]  %s1149, 16, %s1151, %s1138
        $region76: #{custom_nfnet_forward.1} parent=63 // pred_fallthru
          _
      $region64: #{custom_nfnet_forward.1} parent=5 // pred_fallthru
        _
      %p1154 = scmp.le.s32.totalorder 2, %s20
      // Predicated region
      $region77: #{custom_nfnet_forward.1} parent=5 // pred_check
        %p1155 = pneg %p1154
      $region78: #{custom_nfnet_forward.1} parent=5 // pred_check_branch
        %1157 = sbr.rel (%p1155) target = $region80
      $region79: #{custom_nfnet_forward.1} parent=5 // pred_region
        %s1158 = ssub.s32 %s20, 2
        // Predicated region
        $region81: #{custom_nfnet_forward.1} parent=79 // pred_check
          %p1159 = pneg %p299
        $region82: #{custom_nfnet_forward.1} parent=79 // pred_check_branch
          %1161 = sbr.rel (%p1159) target = $region84
        $region83: #{custom_nfnet_forward.1} parent=79 // pred_region
          %s1162 = sand.u32 %s284, 1
          %s1163 = scalar_lea.sflag [#allocation4], %s1162
          %s1164 = sand.u32 %s284, 1
          %s1165 = scalar_lea.vmem [#allocation3], %s1164
          %1167 = dma.done %s1163, 16
        $region84: #{custom_nfnet_forward.1} parent=79 // pred_fallthru
          _
      $region80: #{custom_nfnet_forward.1} parent=5 // pred_fallthru
        _
    $region6: #{custom_nfnet_forward.1} parent=1 // loop_footer
      %s24 = sadd.s32 1, %s20
    $region7: #{custom_nfnet_forward.1} parent=1 // loop_footer_branch
      %19 = sbr.rel target = $region3
    $region8: #{custom_nfnet_forward.1} parent=1 // loop_exit
      _
    %1168 = vsyncpa [#allocation4], 1
    %s1169 = scalar_lea.sflag [#allocation4], 1
    %1170 = vsyncpa %s1169, 1

</llo_original>
